<compile_context>
chip_gen: v5e
topology: v5e:2x2
jax: 0.10.0
libtpu: 0.0.40
codegen_flags: <defaults>
</compile_context>

<pallas_src>
import numpy as np

import jax
import jax.numpy as jnp
from jax.experimental import pallas as pl
from jax.experimental.pallas import tpu as pltpu


LN_EPS = 1e-5


# ----------------------------------------------------------------------------
# Host-side (one-time) parameter preprocessing: exact reformulation of the
# conv / pool layers as dense matrices in the flat (channel, length) layout.
# ----------------------------------------------------------------------------
def _round_up(n, m):
    return ((n + m - 1) // m) * m


def _conv1d_matrix(w, l_in, pad):
    """Conv1d(weight w: (C_out, C_in, K), stride 1, zero pad) as a dense matrix
    A of shape (C_in*l_in, C_out*l_out) acting on flat (c, l)-ordered vectors."""
    w = np.asarray(w, np.float32)
    c_out, c_in, k = w.shape
    l_out = l_in + 2 * pad - k + 1
    a = np.zeros((c_in, l_in, c_out, l_out), np.float32)
    for kk in range(k):
        for l in range(l_out):
            m = l + kk - pad
            if 0 <= m < l_in:
                a[:, m, :, l] += w[:, :, kk].T
    return a.reshape(c_in * l_in, c_out * l_out)


def _pool_select_cat(c, l, p):
    """MaxPool1d(kernel=stride=p) as ONE concatenated selection matrix of shape
    (c*l, p*c*(l//p)): column block r holds the r-th in-window candidate."""
    lo = l // p
    s = np.zeros((c * l, p * c * lo), np.float32)
    for r in range(p):
        for cc in range(c):
            for j in range(lo):
                s[cc * l + p * j + r, r * (c * lo) + cc * lo + j] = 1.0
    return s


def _row(v, width):
    r = np.zeros((width,), np.float32)
    v = np.asarray(v, np.float32).reshape(-1)
    r[: v.size] = v
    return r


def _pad2d(a, rows, cols):
    out = np.zeros((rows, cols), np.float32)
    out[: a.shape[0], : a.shape[1]] = a
    return out


def pack_params(params, *, c_in, look_back, pad1, pad2, pool1, pool2, predict_steps):
    conv1_w = np.asarray(params["conv1_w"], np.float32)   # (C1, C_in, K1)
    conv2_w = np.asarray(params["conv2_w"], np.float32)   # (C2, C1, K2)
    c1, c2 = conv1_w.shape[0], conv2_w.shape[0]

    l1 = look_back + 2 * pad1 - conv1_w.shape[2] + 1       # conv1 out length
    assert l1 == look_back, "LayerNorm([C1, look_back]) requires 'same' conv1"
    l2 = l1 // pool1                                       # after pool1
    l2c = l2 + 2 * pad2 - conv2_w.shape[2] + 1
    assert l2c == l2, "LayerNorm([C2, look_back/pool]) requires 'same' conv2"
    assert l2 == look_back // pool2, "module requires pool1 == pool2 consistency"
    l3 = l2 // pool2

    f0 = c_in * look_back
    f1 = c1 * l1            # conv1 output (flat)
    f1p = c1 * l2           # after pool1
    f2 = c2 * l2            # conv2 output (flat)
    f3 = c2 * l3            # after pool2 = fc1 input
    h1 = np.asarray(params["fc1_w"]).shape[1]
    assert np.asarray(params["fc1_w"]).shape[0] == f3
    n_out = 2 * predict_steps
    no = _round_up(max(n_out, 128), 128)                   # lane-dense output width

    a1 = _conv1d_matrix(conv1_w, look_back, pad1)          # (f0, f1)
    a2 = _conv1d_matrix(conv2_w, l2, pad2)                 # (f1p, f2)
    sel1 = _pool_select_cat(c1, l1, pool1)                 # (f1, pool1*f1p) = (f1, f1)
    sel2 = _pool_select_cat(c2, l2, pool2)                 # (f2, pool2*f3)  = (f2, f2)

    w1 = np.asarray(params["fc1_w"], np.float32)           # (f3, h1)
    w2 = np.asarray(params["fc2_w"], np.float32)           # (h1, 2*P)
    w2p = np.zeros((h1, no), np.float32)
    w2p[:, :n_out] = w2

    # Pack the four dense matrices into one zero-padded (4, R, C) slab.
    R = _round_up(max(f0, f1p, f3, h1), 8)
    C = _round_up(max(f1, f2, h1, no), 128)
    mats = np.stack([_pad2d(a1, R, C), _pad2d(a2, R, C),
                     _pad2d(w1, R, C), _pad2d(w2p, R, C)])

    # Pack both pool selection matrices into one zero-padded (2, Rs, Cs) slab.
    Rs = _round_up(max(f1, f2), 8)
    Cs = _round_up(max(pool1 * f1p, pool2 * f3), 128)
    sels = np.stack([_pad2d(sel1, Rs, Cs), _pad2d(sel2, Rs, Cs)])

    # All bias / LayerNorm vectors in one (10, wv) slab.
    wv = _round_up(max(f1, f2, h1, no), 128)
    vec = np.stack([
        _row(np.repeat(np.asarray(params["conv1_b"], np.float32), l1), wv),  # 0
        _row(params["ln1_g"], wv),                                           # 1
        _row(params["ln1_b"], wv),                                           # 2
        _row(np.repeat(np.asarray(params["conv2_b"], np.float32), l2), wv),  # 3
        _row(params["ln2_g"], wv),                                           # 4
        _row(params["ln2_b"], wv),                                           # 5
        _row(params["fc1_b"], wv),                                           # 6
        _row(params["fc1_ln_g"], wv),                                        # 7
        _row(params["fc1_ln_b"], wv),                                        # 8
        _row(params["fc2_b"], wv),                                           # 9
    ])

    dims = dict(f0=f0, f1=f1, f1p=f1p, f2=f2, f3=f3, h1=h1, no=no,
                p1=pool1, p2=pool2)
    return {"mats": jnp.asarray(mats), "sels": jnp.asarray(sels),
            "vec": jnp.asarray(vec), "dims": dims}


# ----------------------------------------------------------------------------
# Pallas kernel
# ----------------------------------------------------------------------------
def _make_lenet2_kernel(dims):
    f0, f1, f1p, f2, f3, h1, no, p1, p2 = (
        dims["f0"], dims["f1"], dims["f1p"], dims["f2"], dims["f3"],
        dims["h1"], dims["no"], dims["p1"], dims["p2"])

    def kernel(x_ref, mats_ref, sels_ref, vec_ref, o_ref):
        def ln_relu(y, g, b, n):
            # two-pass LayerNorm (biased variance), matches torch numerics
            inv_n = 1.0 / n
            mu = jnp.sum(y, axis=-1, keepdims=True) * inv_n
            d = y - mu
            var = jnp.sum(d * d, axis=-1, keepdims=True) * inv_n
            return jnp.maximum(d * jax.lax.rsqrt(var + LN_EPS) * g + b, 0.0)

        def pool_max(z, sel, p, fo):
            # single fused selection matmul, then max over p column halves
            zz = jnp.dot(z, sel, preferred_element_type=jnp.float32)
            out = zz[:, :fo]
            for r in range(1, p):
                out = jnp.maximum(out, zz[:, r * fo:(r + 1) * fo])
            return out

        h = x_ref[...].astype(jnp.float32)

        # conv1 (block-Toeplitz matmul) + LayerNorm([C1, L]) + ReLU + MaxPool1d
        z = (jnp.dot(h, mats_ref[0, :f0, :f1], preferred_element_type=jnp.float32)
             + vec_ref[0:1, :f1])
        z = ln_relu(z, vec_ref[1:2, :f1], vec_ref[2:3, :f1], f1)
        h = pool_max(z, sels_ref[0, :f1, :p1 * f1p], p1, f1p)

        # conv2 + LayerNorm([C2, L2]) + ReLU + MaxPool1d
        z = (jnp.dot(h, mats_ref[1, :f1p, :f2], preferred_element_type=jnp.float32)
             + vec_ref[3:4, :f2])
        z = ln_relu(z, vec_ref[4:5, :f2], vec_ref[5:6, :f2], f2)
        h = pool_max(z, sels_ref[1, :f2, :p2 * f3], p2, f3)

        # fc1 + LayerNorm + ReLU   (flatten is already the (c, l) flat layout)
        z = (jnp.dot(h, mats_ref[2, :f3, :h1], preferred_element_type=jnp.float32)
             + vec_ref[6:7, :h1])
        h = ln_relu(z, vec_ref[7:8, :h1], vec_ref[8:9, :h1], h1)

        # fc2 -> lane-dense (padded to 128) output store
        o_ref[...] = (jnp.dot(h, mats_ref[3, :h1, :no],
                              preferred_element_type=jnp.float32)
                      + vec_ref[9:10, :no]).astype(o_ref.dtype)

    return kernel


# ----------------------------------------------------------------------------
# Wrapper: generation-aware batch tiling + pallas_call
# ----------------------------------------------------------------------------
def _batch_row_mult():
    """Batch-tile row granularity: 128 on v5e (128-deep MXU), 256 on v6e/v7x."""
    try:
        kind = jax.devices()[0].device_kind.lower()
        if "v5 lite" in kind or "v5e" in kind or "v5litepod" in kind:
            return 128
    except Exception:
        pass
    return 256


def _pick_batch_tile(b, block_b):
    mult = _batch_row_mult()
    b8 = _round_up(max(b, 1), 8)
    if b8 <= mult:
        return b8                       # too small to split: single tiny tile
    # >= 2 grid steps (feeds both v7x TensorCores), tiles `mult`-aligned,
    # capped at block_b (VMEM stays far below the 32 MiB budget even at 2048).
    half = _round_up((b8 + 1) // 2, mult)
    tb = min(_round_up(block_b, mult), half)
    return max(mult, tb)


def lenet2_forward(x, kparams, *, predict_steps, block_b=1024):
    """x: (B, C_in, look_back) float32. Returns (B, 2, predict_steps)."""
    dims = kparams["dims"]
    b, c_in, look_back = x.shape
    f0 = c_in * look_back
    assert f0 == dims["f0"], (f0, dims["f0"])
    no = dims["no"]

    x_flat = x.reshape(b, f0).astype(jnp.float32)
    tb = _pick_batch_tile(b, block_b)
    b_pad = _round_up(b, tb)
    if b_pad != b:
        x_flat = jnp.pad(x_flat, ((0, b_pad - b), (0, 0)))

    mats, sels, vec = kparams["mats"], kparams["sels"], kparams["vec"]
    kernel = _make_lenet2_kernel(dims)

    out = pl.pallas_call(
        kernel,
        out_shape=jax.ShapeDtypeStruct((b_pad, no), jnp.float32),
        grid=(b_pad // tb,),
        in_specs=[
            pl.BlockSpec((tb, f0), lambda i: (i, 0)),
            # weights: full blocks with constant index maps -> fetched once,
            # VMEM-resident across all grid steps
            pl.BlockSpec(mats.shape, lambda i: (0, 0, 0)),
            pl.BlockSpec(sels.shape, lambda i: (0, 0, 0)),
            pl.BlockSpec(vec.shape, lambda i: (0, 0)),
        ],
        out_specs=pl.BlockSpec((tb, no), lambda i: (i, 0)),
        compiler_params=pltpu.CompilerParams(
            dimension_semantics=("parallel",),     # shard batch tiles across TCs
            vmem_limit_bytes=32 * 1024 * 1024,     # safe on v5e/v6e/v7x; ample here
        ),
    )(x_flat, mats, sels, vec)

    out = out[:b, : 2 * predict_steps]
    return out.reshape(b, 2, predict_steps)


# ----------------------------------------------------------------------------
# Deterministic parameter init (torch-default-like) and pure-JAX reference.
# ----------------------------------------------------------------------------
def init_params(key, *, c_in, look_back, c1, c2, k1, k2, pool1, pool2, h1,
                predict_steps):
    l2 = look_back // pool1
    l3 = l2 // pool2
    f3 = c2 * l3
    ks = jax.random.split(key, 8)

    def u(k, shape, fan_in):
        bound = 1.0 / float(np.sqrt(fan_in))
        return jax.random.uniform(k, shape, jnp.float32, -bound, bound)

    return dict(
        conv1_w=u(ks[0], (c1, c_in, k1), c_in * k1),
        conv1_b=u(ks[1], (c1,), c_in * k1),
        ln1_g=jnp.ones((c1, look_back), jnp.float32),
        ln1_b=jnp.zeros((c1, look_back), jnp.float32),
        conv2_w=u(ks[2], (c2, c1, k2), c1 * k2),
        conv2_b=u(ks[3], (c2,), c1 * k2),
        ln2_g=jnp.ones((c2, l2), jnp.float32),
        ln2_b=jnp.zeros((c2, l2), jnp.float32),
        fc1_w=u(ks[4], (f3, h1), f3),
        fc1_b=u(ks[5], (h1,), f3),
        fc1_ln_g=jnp.ones((h1,), jnp.float32),
        fc1_ln_b=jnp.zeros((h1,), jnp.float32),
        fc2_w=u(ks[6], (h1, 2 * predict_steps), h1),
        fc2_b=u(ks[7], (2 * predict_steps,), h1),
    )


def _ln_ref(y, g, b):
    mu = jnp.mean(y, axis=-1, keepdims=True)
    var = jnp.mean(jnp.square(y - mu), axis=-1, keepdims=True)
    return (y - mu) * jax.lax.rsqrt(var + LN_EPS) * g + b


def _maxpool1d(y, p):
    bb, c, l = y.shape
    return y.reshape(bb, c, l // p, p).max(axis=-1)


def reference_forward(x, p, *, pad1, pad2, pool1, pool2, predict_steps):
    b = x.shape[0]
    dn = ("NCH", "OIH", "NCH")
    y = jax.lax.conv_general_dilated(x, p["conv1_w"], (1,), [(pad1, pad1)],
                                     dimension_numbers=dn)
    y = y + p["conv1_b"][None, :, None]
    y = _ln_ref(y.reshape(b, -1), p["ln1_g"].reshape(-1),
                p["ln1_b"].reshape(-1)).reshape(y.shape)
    y = jnp.maximum(y, 0.0)
    y = _maxpool1d(y, pool1)
    y = jax.lax.conv_general_dilated(y, p["conv2_w"], (1,), [(pad2, pad2)],
                                     dimension_numbers=dn)
    y = y + p["conv2_b"][None, :, None]
    y = _ln_ref(y.reshape(b, -1), p["ln2_g"].reshape(-1),
                p["ln2_b"].reshape(-1)).reshape(y.shape)
    y = jnp.maximum(y, 0.0)
    y = _maxpool1d(y, pool2)
    h = y.reshape(b, -1)
    h = jnp.maximum(_ln_ref(h @ p["fc1_w"] + p["fc1_b"],
                            p["fc1_ln_g"], p["fc1_ln_b"]), 0.0)
    out = h @ p["fc2_w"] + p["fc2_b"]
    return out.reshape(b, 2, predict_steps)


if __name__ == "__main__":
    # Small config consistent with the module:
    #   input_shape = (B, C_in, look_back) = (2, 4, 16)
    #   conv_1_out_channels=8, conv_2_out_channels=16, kernels=3, padding=1,
    #   pool kernels=2, fc_1_out_features=32, predict_steps=4 -> output (B, 2, 4)
    B, C_IN, LOOK_BACK = 2, 4, 16
    C1, C2 = 8, 16
    K1 = K2 = 3
    PAD1 = PAD2 = 1
    POOL1 = POOL2 = 2
    H1 = 32
    PRED = 4

    key = jax.random.PRNGKey(0)
    kx, kparam = jax.random.split(key)
    x = jax.random.normal(kx, (B, C_IN, LOOK_BACK), dtype=jnp.float32)
    params = init_params(kparam, c_in=C_IN, look_back=LOOK_BACK, c1=C1, c2=C2,
                         k1=K1, k2=K2, pool1=POOL1, pool2=POOL2, h1=H1,
                         predict_steps=PRED)
    kernel_params = pack_params(params, c_in=C_IN, look_back=LOOK_BACK,
                                pad1=PAD1, pad2=PAD2, pool1=POOL1, pool2=POOL2,
                                predict_steps=PRED)

    out = lenet2_forward(x, kernel_params, predict_steps=PRED)
    out = jax.block_until_ready(out)

    ref = reference_forward(x, params, pad1=PAD1, pad2=PAD2,
                            pool1=POOL1, pool2=POOL2, predict_steps=PRED)
    assert out.shape == (B, 2, PRED), out.shape
    assert jnp.allclose(out, ref, atol=1e-4, rtol=1e-4), (out, ref)
    print("KERNEL_OK")
</pallas_src>

<mosaic_0001>
module attributes {stable_mosaic.version = 11 : i64} {
  func.func @kernel(%arg0: i32, %arg1: memref<8x64xf32, #tpu.memory_space<vmem>>, %arg2: memref<4x64x128xf32, #tpu.memory_space<vmem>>, %arg3: memref<2x128x128xf32, #tpu.memory_space<vmem>>, %arg4: memref<10x128xf32, #tpu.memory_space<vmem>>, %arg5: memref<8x128xf32, #tpu.memory_space<vmem>>) attributes {dimension_semantics = [#tpu.dimension_semantics<parallel>], iteration_bounds = array<i64: 1>, scalar_prefetch = 0 : i64, scratch_operands = 0 : i64, tpu.core_type = #tpu.core_type<tc>, window_params = [{transform_indices = @transform_0, window_bounds = array<i64: 8, 64>}, {pipeline_mode = #tpu.pipeline_mode<synchronous>, transform_indices = @transform_1, window_bounds = array<i64: 4, 64, 128>}, {pipeline_mode = #tpu.pipeline_mode<synchronous>, transform_indices = @transform_2, window_bounds = array<i64: 2, 128, 128>}, {pipeline_mode = #tpu.pipeline_mode<synchronous>, transform_indices = @transform_3, window_bounds = array<i64: 10, 128>}, {transform_indices = @transform_4, window_bounds = array<i64: 8, 128>}]} {
    %c0 = arith.constant 0 : index
    %c0_0 = arith.constant 0 : index
    %0 = vector.load %arg1[%c0, %c0_0] : memref<8x64xf32, #tpu.memory_space<vmem>>, vector<8x64xf32>
    %c0_1 = arith.constant 0 : index
    %c0_2 = arith.constant 0 : index
    %c0_3 = arith.constant 0 : index
    %1 = vector.load %arg2[%c0_1, %c0_2, %c0_3] : memref<4x64x128xf32, #tpu.memory_space<vmem>>, vector<1x64x128xf32>
    %2 = vector.shape_cast %1 : vector<1x64x128xf32> to vector<64x128xf32>
    %cst = arith.constant dense<0.000000e+00> : vector<8x128xf32>
    %3 = tpu.matmul %0, %2, %cst {dimension_numbers = #tpu.dot_dimension_numbers<[1], [0], [0], [1], [0, 0, 1, 1], [], []>} : vector<8x64xf32>, vector<64x128xf32>, vector<8x128xf32> -> vector<8x128xf32>
    %c0_4 = arith.constant 0 : index
    %c0_5 = arith.constant 0 : index
    %4 = vector.load %arg4[%c0_4, %c0_5] : memref<10x128xf32, #tpu.memory_space<vmem>>, vector<1x128xf32>
    %5 = vector.broadcast %4 : vector<1x128xf32> to vector<8x128xf32>
    %6 = arith.addf %3, %5 : vector<8x128xf32>
    %c1 = arith.constant 1 : index
    %c0_6 = arith.constant 0 : index
    %7 = vector.load %arg4[%c1, %c0_6] : memref<10x128xf32, #tpu.memory_space<vmem>>, vector<1x128xf32>
    %c2 = arith.constant 2 : index
    %c0_7 = arith.constant 0 : index
    %8 = vector.load %arg4[%c2, %c0_7] : memref<10x128xf32, #tpu.memory_space<vmem>>, vector<1x128xf32>
    %cst_8 = arith.constant dense<0.000000e+00> : vector<8xf32>
    %9 = vector.multi_reduction <add>, %6, %cst_8 [1] : vector<8x128xf32> to vector<8xf32>
    %10 = vector.shape_cast %9 : vector<8xf32> to vector<8x1xf32>
    %cst_9 = arith.constant 7.812500e-03 : f32
    %11 = vector.broadcast %cst_9 : f32 to vector<8x1xf32>
    %12 = arith.mulf %10, %11 : vector<8x1xf32>
    %13 = vector.broadcast %12 : vector<8x1xf32> to vector<8x128xf32>
    %14 = arith.subf %6, %13 : vector<8x128xf32>
    %15 = arith.mulf %14, %14 : vector<8x128xf32>
    %cst_10 = arith.constant dense<0.000000e+00> : vector<8xf32>
    %16 = vector.multi_reduction <add>, %15, %cst_10 [1] : vector<8x128xf32> to vector<8xf32>
    %17 = vector.shape_cast %16 : vector<8xf32> to vector<8x1xf32>
    %cst_11 = arith.constant 7.812500e-03 : f32
    %18 = vector.broadcast %cst_11 : f32 to vector<8x1xf32>
    %19 = arith.mulf %17, %18 : vector<8x1xf32>
    %cst_12 = arith.constant 9.99999974E-6 : f32
    %20 = vector.broadcast %cst_12 : f32 to vector<8x1xf32>
    %21 = arith.addf %19, %20 : vector<8x1xf32>
    %22 = math.rsqrt %21 : vector<8x1xf32>
    %23 = vector.broadcast %22 : vector<8x1xf32> to vector<8x128xf32>
    %24 = arith.mulf %14, %23 : vector<8x128xf32>
    %25 = vector.broadcast %7 : vector<1x128xf32> to vector<8x128xf32>
    %26 = arith.mulf %24, %25 : vector<8x128xf32>
    %27 = vector.broadcast %8 : vector<1x128xf32> to vector<8x128xf32>
    %28 = arith.addf %26, %27 : vector<8x128xf32>
    %cst_13 = arith.constant 0.000000e+00 : f32
    %29 = vector.broadcast %cst_13 : f32 to vector<8x128xf32>
    %30 = arith.maximumf %28, %29 : vector<8x128xf32>
    %c0_14 = arith.constant 0 : index
    %c0_15 = arith.constant 0 : index
    %c0_16 = arith.constant 0 : index
    %31 = vector.load %arg3[%c0_14, %c0_15, %c0_16] : memref<2x128x128xf32, #tpu.memory_space<vmem>>, vector<1x128x128xf32>
    %32 = vector.shape_cast %31 : vector<1x128x128xf32> to vector<128x128xf32>
    %cst_17 = arith.constant dense<0.000000e+00> : vector<8x128xf32>
    %33 = tpu.matmul %30, %32, %cst_17 {dimension_numbers = #tpu.dot_dimension_numbers<[1], [0], [0], [1], [0, 0, 1, 1], [], []>} : vector<8x128xf32>, vector<128x128xf32>, vector<8x128xf32> -> vector<8x128xf32>
    %34 = vector.extract_strided_slice %33 {offsets = [0, 0], sizes = [8, 64], strides = [1, 1]} : vector<8x128xf32> to vector<8x64xf32>
    %35 = vector.extract_strided_slice %33 {offsets = [0, 64], sizes = [8, 64], strides = [1, 1]} : vector<8x128xf32> to vector<8x64xf32>
    %36 = arith.maximumf %34, %35 : vector<8x64xf32>
    %c1_18 = arith.constant 1 : index
    %c0_19 = arith.constant 0 : index
    %c0_20 = arith.constant 0 : index
    %37 = vector.load %arg2[%c1_18, %c0_19, %c0_20] : memref<4x64x128xf32, #tpu.memory_space<vmem>>, vector<1x64x128xf32>
    %38 = vector.shape_cast %37 : vector<1x64x128xf32> to vector<64x128xf32>
    %cst_21 = arith.constant dense<0.000000e+00> : vector<8x128xf32>
    %39 = tpu.matmul %36, %38, %cst_21 {dimension_numbers = #tpu.dot_dimension_numbers<[1], [0], [0], [1], [0, 0, 1, 1], [], []>} : vector<8x64xf32>, vector<64x128xf32>, vector<8x128xf32> -> vector<8x128xf32>
    %c3 = arith.constant 3 : index
    %c0_22 = arith.constant 0 : index
    %40 = vector.load %arg4[%c3, %c0_22] : memref<10x128xf32, #tpu.memory_space<vmem>>, vector<1x128xf32>
    %41 = vector.broadcast %40 : vector<1x128xf32> to vector<8x128xf32>
    %42 = arith.addf %39, %41 : vector<8x128xf32>
    %c4 = arith.constant 4 : index
    %c0_23 = arith.constant 0 : index
    %43 = vector.load %arg4[%c4, %c0_23] : memref<10x128xf32, #tpu.memory_space<vmem>>, vector<1x128xf32>
    %c5 = arith.constant 5 : index
    %c0_24 = arith.constant 0 : index
    %44 = vector.load %arg4[%c5, %c0_24] : memref<10x128xf32, #tpu.memory_space<vmem>>, vector<1x128xf32>
    %cst_25 = arith.constant dense<0.000000e+00> : vector<8xf32>
    %45 = vector.multi_reduction <add>, %42, %cst_25 [1] : vector<8x128xf32> to vector<8xf32>
    %46 = vector.shape_cast %45 : vector<8xf32> to vector<8x1xf32>
    %cst_26 = arith.constant 7.812500e-03 : f32
    %47 = vector.broadcast %cst_26 : f32 to vector<8x1xf32>
    %48 = arith.mulf %46, %47 : vector<8x1xf32>
    %49 = vector.broadcast %48 : vector<8x1xf32> to vector<8x128xf32>
    %50 = arith.subf %42, %49 : vector<8x128xf32>
    %51 = arith.mulf %50, %50 : vector<8x128xf32>
    %cst_27 = arith.constant dense<0.000000e+00> : vector<8xf32>
    %52 = vector.multi_reduction <add>, %51, %cst_27 [1] : vector<8x128xf32> to vector<8xf32>
    %53 = vector.shape_cast %52 : vector<8xf32> to vector<8x1xf32>
    %cst_28 = arith.constant 7.812500e-03 : f32
    %54 = vector.broadcast %cst_28 : f32 to vector<8x1xf32>
    %55 = arith.mulf %53, %54 : vector<8x1xf32>
    %cst_29 = arith.constant 9.99999974E-6 : f32
    %56 = vector.broadcast %cst_29 : f32 to vector<8x1xf32>
    %57 = arith.addf %55, %56 : vector<8x1xf32>
    %58 = math.rsqrt %57 : vector<8x1xf32>
    %59 = vector.broadcast %58 : vector<8x1xf32> to vector<8x128xf32>
    %60 = arith.mulf %50, %59 : vector<8x128xf32>
    %61 = vector.broadcast %43 : vector<1x128xf32> to vector<8x128xf32>
    %62 = arith.mulf %60, %61 : vector<8x128xf32>
    %63 = vector.broadcast %44 : vector<1x128xf32> to vector<8x128xf32>
    %64 = arith.addf %62, %63 : vector<8x128xf32>
    %cst_30 = arith.constant 0.000000e+00 : f32
    %65 = vector.broadcast %cst_30 : f32 to vector<8x128xf32>
    %66 = arith.maximumf %64, %65 : vector<8x128xf32>
    %c1_31 = arith.constant 1 : index
    %c0_32 = arith.constant 0 : index
    %c0_33 = arith.constant 0 : index
    %67 = vector.load %arg3[%c1_31, %c0_32, %c0_33] : memref<2x128x128xf32, #tpu.memory_space<vmem>>, vector<1x128x128xf32>
    %68 = vector.shape_cast %67 : vector<1x128x128xf32> to vector<128x128xf32>
    %cst_34 = arith.constant dense<0.000000e+00> : vector<8x128xf32>
    %69 = tpu.matmul %66, %68, %cst_34 {dimension_numbers = #tpu.dot_dimension_numbers<[1], [0], [0], [1], [0, 0, 1, 1], [], []>} : vector<8x128xf32>, vector<128x128xf32>, vector<8x128xf32> -> vector<8x128xf32>
    %70 = vector.extract_strided_slice %69 {offsets = [0, 0], sizes = [8, 64], strides = [1, 1]} : vector<8x128xf32> to vector<8x64xf32>
    %71 = vector.extract_strided_slice %69 {offsets = [0, 64], sizes = [8, 64], strides = [1, 1]} : vector<8x128xf32> to vector<8x64xf32>
    %72 = arith.maximumf %70, %71 : vector<8x64xf32>
    %c2_35 = arith.constant 2 : index
    %c0_36 = arith.constant 0 : index
    %c0_37 = arith.constant 0 : index
    %73 = vector.load %arg2[%c2_35, %c0_36, %c0_37] : memref<4x64x128xf32, #tpu.memory_space<vmem>>, vector<1x64x32xf32>
    %74 = vector.shape_cast %73 : vector<1x64x32xf32> to vector<64x32xf32>
    %cst_38 = arith.constant dense<0.000000e+00> : vector<8x32xf32>
    %75 = tpu.matmul %72, %74, %cst_38 {dimension_numbers = #tpu.dot_dimension_numbers<[1], [0], [0], [1], [0, 0, 1, 1], [], []>} : vector<8x64xf32>, vector<64x32xf32>, vector<8x32xf32> -> vector<8x32xf32>
    %c6 = arith.constant 6 : index
    %c0_39 = arith.constant 0 : index
    %76 = vector.load %arg4[%c6, %c0_39] : memref<10x128xf32, #tpu.memory_space<vmem>>, vector<1x32xf32>
    %77 = vector.broadcast %76 : vector<1x32xf32> to vector<8x32xf32>
    %78 = arith.addf %75, %77 : vector<8x32xf32>
    %c7 = arith.constant 7 : index
    %c0_40 = arith.constant 0 : index
    %79 = vector.load %arg4[%c7, %c0_40] : memref<10x128xf32, #tpu.memory_space<vmem>>, vector<1x32xf32>
    %c8 = arith.constant 8 : index
    %c0_41 = arith.constant 0 : index
    %80 = vector.load %arg4[%c8, %c0_41] : memref<10x128xf32, #tpu.memory_space<vmem>>, vector<1x32xf32>
    %cst_42 = arith.constant dense<0.000000e+00> : vector<8xf32>
    %81 = vector.multi_reduction <add>, %78, %cst_42 [1] : vector<8x32xf32> to vector<8xf32>
    %82 = vector.shape_cast %81 : vector<8xf32> to vector<8x1xf32>
    %cst_43 = arith.constant 3.125000e-02 : f32
    %83 = vector.broadcast %cst_43 : f32 to vector<8x1xf32>
    %84 = arith.mulf %82, %83 : vector<8x1xf32>
    %85 = vector.broadcast %84 : vector<8x1xf32> to vector<8x32xf32>
    %86 = arith.subf %78, %85 : vector<8x32xf32>
    %87 = arith.mulf %86, %86 : vector<8x32xf32>
    %cst_44 = arith.constant dense<0.000000e+00> : vector<8xf32>
    %88 = vector.multi_reduction <add>, %87, %cst_44 [1] : vector<8x32xf32> to vector<8xf32>
    %89 = vector.shape_cast %88 : vector<8xf32> to vector<8x1xf32>
    %cst_45 = arith.constant 3.125000e-02 : f32
    %90 = vector.broadcast %cst_45 : f32 to vector<8x1xf32>
    %91 = arith.mulf %89, %90 : vector<8x1xf32>
    %cst_46 = arith.constant 9.99999974E-6 : f32
    %92 = vector.broadcast %cst_46 : f32 to vector<8x1xf32>
    %93 = arith.addf %91, %92 : vector<8x1xf32>
    %94 = math.rsqrt %93 : vector<8x1xf32>
    %95 = vector.broadcast %94 : vector<8x1xf32> to vector<8x32xf32>
    %96 = arith.mulf %86, %95 : vector<8x32xf32>
    %97 = vector.broadcast %79 : vector<1x32xf32> to vector<8x32xf32>
    %98 = arith.mulf %96, %97 : vector<8x32xf32>
    %99 = vector.broadcast %80 : vector<1x32xf32> to vector<8x32xf32>
    %100 = arith.addf %98, %99 : vector<8x32xf32>
    %cst_47 = arith.constant 0.000000e+00 : f32
    %101 = vector.broadcast %cst_47 : f32 to vector<8x32xf32>
    %102 = arith.maximumf %100, %101 : vector<8x32xf32>
    %c3_48 = arith.constant 3 : index
    %c0_49 = arith.constant 0 : index
    %c0_50 = arith.constant 0 : index
    %103 = vector.load %arg2[%c3_48, %c0_49, %c0_50] : memref<4x64x128xf32, #tpu.memory_space<vmem>>, vector<1x32x128xf32>
    %104 = vector.shape_cast %103 : vector<1x32x128xf32> to vector<32x128xf32>
    %cst_51 = arith.constant dense<0.000000e+00> : vector<8x128xf32>
    %105 = tpu.matmul %102, %104, %cst_51 {dimension_numbers = #tpu.dot_dimension_numbers<[1], [0], [0], [1], [0, 0, 1, 1], [], []>} : vector<8x32xf32>, vector<32x128xf32>, vector<8x128xf32> -> vector<8x128xf32>
    %c9 = arith.constant 9 : index
    %c0_52 = arith.constant 0 : index
    %106 = vector.load %arg4[%c9, %c0_52] : memref<10x128xf32, #tpu.memory_space<vmem>>, vector<1x128xf32>
    %107 = vector.broadcast %106 : vector<1x128xf32> to vector<8x128xf32>
    %108 = arith.addf %105, %107 : vector<8x128xf32>
    %c0_53 = arith.constant 0 : index
    %c0_54 = arith.constant 0 : index
    %109 = vector.load %arg5[%c0_53, %c0_54] : memref<8x128xf32, #tpu.memory_space<vmem>>, vector<8x128xf32>
    tpu.vector_store %arg5[%c0_53, %c0_54], %108 {strides = array<i32>} : memref<8x128xf32, #tpu.memory_space<vmem>>, vector<8x128xf32>,
    return
  }
  func.func @transform_0(%arg0: i32) -> (i32, i32) {
    %c0_i32 = arith.constant 0 : i32
    %c0_i32_0 = arith.constant 0 : i32
    return %arg0, %c0_i32 : i32, i32
  }
  func.func @transform_1(%arg0: i32) -> (i32, i32, i32) {
    %c0_i32 = arith.constant 0 : i32
    %c0_i32_0 = arith.constant 0 : i32
    %c0_i32_1 = arith.constant 0 : i32
    %c0_i32_2 = arith.constant 0 : i32
    return %c0_i32, %c0_i32_0, %c0_i32_1 : i32, i32, i32
  }
  func.func @transform_2(%arg0: i32) -> (i32, i32, i32) {
    %c0_i32 = arith.constant 0 : i32
    %c0_i32_0 = arith.constant 0 : i32
    %c0_i32_1 = arith.constant 0 : i32
    %c0_i32_2 = arith.constant 0 : i32
    return %c0_i32, %c0_i32_0, %c0_i32_1 : i32, i32, i32
  }
  func.func @transform_3(%arg0: i32) -> (i32, i32) {
    %c0_i32 = arith.constant 0 : i32
    %c0_i32_0 = arith.constant 0 : i32
    %c0_i32_1 = arith.constant 0 : i32
    return %c0_i32, %c0_i32_0 : i32, i32
  }
  func.func @transform_4(%arg0: i32) -> (i32, i32) {
    %c0_i32 = arith.constant 0 : i32
    %c0_i32_0 = arith.constant 0 : i32
    return %arg0, %c0_i32 : i32, i32
  }
}

</mosaic_0001>

<llo_original>
// kernel: tpu_custom_call.1
$region0: #{tpu_custom_call.1}
  #allocation0 [shape = 'u32[]', space=smem, size = 0x4, offset = 0x4, fixed_abs, tag = 'smem constant byte address 0x4 - core index']
  #allocation1 [shape = 'u32[72,128]{1,0:T(1,128)}', space=vmem, size = 0x9000, scoped, tag = 'internal scratch']
  %s0 = inlined_call_operand.hbm [shape: f32[8,64], index: 0, kind: input, shape index: {}]
  %s1 = inlined_call_operand.hbm [shape: f32[4,64,128], index: 1, kind: input, shape index: {}]
  %s2 = inlined_call_operand.hbm [shape: f32[2,128,128], index: 2, kind: input, shape index: {}]
  %s3 = inlined_call_operand.hbm [shape: f32[10,128], index: 3, kind: input, shape index: {}]
  %s4 = inlined_call_operand.hbm [shape: f32[8,128], index: 4, kind: output, shape index: {}]
  %s5 = sld [smem:[#allocation0]]
  $region42: #{tpu_custom_call.1} parent=0
    _
  %s7 = ssub.s32 1, %s5
  %s8 = scalar_select 0, %s7, %s5
  $region1: #{tpu_custom_call.1} parent=0
    #allocation2 [shape = 'u8[4096]{0}', space=vmem, size = 0x1000, scoped, tag = 'input window, operand 0, single buffered']
    #allocation3 [shape = 's32[1]{0}', space=sflag, size = 0x4, scoped, tag = 'scoped memory for tpu_custom_call.1']
    #allocation4 [shape = 's32[1]{0}', space=sflag, size = 0x4, scoped, tag = 'scoped memory for tpu_custom_call.1']
    #allocation5 [shape = 'u8[131072]{0}', space=vmem, size = 0x20000, scoped, tag = 'input window, operand 1, single buffered']
    #allocation6 [shape = 's32[1]{0}', space=sflag, size = 0x4, scoped, tag = 'scoped memory for tpu_custom_call.1']
    #allocation7 [shape = 'u8[131072]{0}', space=vmem, size = 0x20000, scoped, tag = 'input window, operand 2, single buffered']
    #allocation8 [shape = 'u8[8192]{0}', space=vmem, size = 0x2000, scoped, tag = 'input window, operand 3, single buffered']
    #allocation9 [shape = 's32[1]{0}', space=sflag, size = 0x4, scoped, tag = 'scoped memory for tpu_custom_call.1']
    #allocation10 [shape = 'u8[4096]{0}', space=vmem, size = 0x1000, scoped, tag = 'output window, operand 0, single buffered']
    %9 = vsyncpa [#allocation3], 0
    %10 = vsyncpa [#allocation6], 0
    %11 = vsyncpa [#allocation9], 0
    %12 = vsyncpa [#allocation4], 0
    // Predicated region
    $region2: #{tpu_custom_call.1} parent=1 // pred_check
      _
    $region3: #{tpu_custom_call.1} parent=1 // pred_check_branch
      %14 = sbr.rel (0) target = $region5
    $region4: #{tpu_custom_call.1} parent=1 // pred_region
      %16 = vsyncadd [#allocation3], 0
      %s18 = sshll.u32 %s0, 4
      %s19 = int_to_ptr.hbm [resolvable:$true] %s18
      %s20 = sshll.u32 [#allocation2], 4
      %s21 = int_to_ptr.vmem [resolvable:$true] %s20
      %23 = dma.hbm_to_vmem [thread:$0]  %s19, 128, %s21, [#allocation3]
    $region5: #{tpu_custom_call.1} parent=1 // pred_fallthru
      _
    // Predicated region
    $region6: #{tpu_custom_call.1} parent=1 // pred_check
      _
    $region7: #{tpu_custom_call.1} parent=1 // pred_check_branch
      %25 = sbr.rel (0) target = $region9
    $region8: #{tpu_custom_call.1} parent=1 // pred_region
      %27 = vsyncadd [#allocation6], 0
      %s28 = sshll.u32 %s1, 4
      %s29 = int_to_ptr.hbm [resolvable:$true] %s28
      %s30 = sshll.u32 [#allocation5], 4
      %s31 = int_to_ptr.vmem [resolvable:$true] %s30
      %36 = dma.hbm_to_vmem [thread:$0]  %s29, 4096, %s31, [#allocation6], 128, 128, 8
    $region9: #{tpu_custom_call.1} parent=1 // pred_fallthru
      _
    // Predicated region
    $region10: #{tpu_custom_call.1} parent=1 // pred_check
      _
    $region11: #{tpu_custom_call.1} parent=1 // pred_check_branch
      %38 = sbr.rel (0) target = $region13
    $region12: #{tpu_custom_call.1} parent=1 // pred_region
      %40 = vsyncadd [#allocation6], 0
      %s41 = sshll.u32 %s2, 4
      %s42 = int_to_ptr.hbm [resolvable:$true] %s41
      %s43 = sshll.u32 [#allocation7], 4
      %s44 = int_to_ptr.vmem [resolvable:$true] %s43
      %49 = dma.hbm_to_vmem [thread:$0]  %s42, 4096, %s44, [#allocation6], 128, 128, 8
    $region13: #{tpu_custom_call.1} parent=1 // pred_fallthru
      _
    // Predicated region
    $region14: #{tpu_custom_call.1} parent=1 // pred_check
      _
    $region15: #{tpu_custom_call.1} parent=1 // pred_check_branch
      %51 = sbr.rel (0) target = $region17
    $region16: #{tpu_custom_call.1} parent=1 // pred_region
      %53 = vsyncadd [#allocation9], 0
      %s54 = sshll.u32 %s3, 4
      %s55 = int_to_ptr.hbm [resolvable:$true] %s54
      %s56 = sshll.u32 [#allocation8], 4
      %s57 = int_to_ptr.vmem [resolvable:$true] %s56
      %62 = dma.hbm_to_vmem [thread:$0]  %s55, 256, %s57, [#allocation9], 128, 128, 8
    $region17: #{tpu_custom_call.1} parent=1 // pred_fallthru
      _
    // Predicated region
    $region18: #{tpu_custom_call.1} parent=1 // pred_check
      _
    $region19: #{tpu_custom_call.1} parent=1 // pred_check_branch
      %64 = sbr.rel (0) target = $region21
    $region20: #{tpu_custom_call.1} parent=1 // pred_region
      %66 = dma.done [#allocation3], 128
    $region21: #{tpu_custom_call.1} parent=1 // pred_fallthru
      _
    // Predicated region
    $region22: #{tpu_custom_call.1} parent=1 // pred_check
      _
    $region23: #{tpu_custom_call.1} parent=1 // pred_check_branch
      %68 = sbr.rel (0) target = $region25
    $region24: #{tpu_custom_call.1} parent=1 // pred_region
      %70 = dma.done [#allocation6], 4096
    $region25: #{tpu_custom_call.1} parent=1 // pred_fallthru
      _
    // Predicated region
    $region26: #{tpu_custom_call.1} parent=1 // pred_check
      _
    $region27: #{tpu_custom_call.1} parent=1 // pred_check_branch
      %72 = sbr.rel (0) target = $region29
    $region28: #{tpu_custom_call.1} parent=1 // pred_region
      %74 = dma.done [#allocation6], 4096
    $region29: #{tpu_custom_call.1} parent=1 // pred_fallthru
      _
    // Predicated region
    $region30: #{tpu_custom_call.1} parent=1 // pred_check
      _
    $region31: #{tpu_custom_call.1} parent=1 // pred_check_branch
      %76 = sbr.rel (0) target = $region33
    $region32: #{tpu_custom_call.1} parent=1 // pred_region
      %78 = dma.done [#allocation9], 256
    $region33: #{tpu_custom_call.1} parent=1 // pred_fallthru
      _
    %v79 = vld [vmem:[#allocation2] sm:$0xff]
    %v80 = vld [vmem:[#allocation5] sm:$0xff]
    %v81 = vld [vmem:[#allocation5 + $0x8] sm:$0xff]
    %v82 = vld [vmem:[#allocation5 + $0x10] sm:$0xff]
    %v83 = vld [vmem:[#allocation5 + $0x18] sm:$0xff]
    %v84 = vld [vmem:[#allocation5 + $0x20] sm:$0xff]
    %v85 = vld [vmem:[#allocation5 + $0x28] sm:$0xff]
    %v86 = vld [vmem:[#allocation5 + $0x30] sm:$0xff]
    %v87 = vld [vmem:[#allocation5 + $0x38] sm:$0xff]
    %v88 = vld [vmem:[#allocation8] sm:$0x1]
    %v89 = vperm.slane %v88, 0
    %vm90 = vcmask 523264
    %v92 = vsel %vm90, %v79, 0
    %94 = vmatpush.msra.mxu0 0.0
    %95 = vmatpush.msra.mxu0 0.0
    %96 = vmatpush.msra.mxu0 0.0
    %97 = vmatpush.msra.mxu0 0.0
    %98 = vmatpush.msra.mxu0 0.0
    %99 = vmatpush.msra.mxu0 0.0
    %100 = vmatpush.msra.mxu0 0.0
    %101 = vmatpush.msra.mxu0 0.0
    %102 = vmatpush.msra.mxu0 %v87
    %103 = vmatpush.msra.mxu0 %v86
    %104 = vmatpush.msra.mxu0 %v85
    %105 = vmatpush.msra.mxu0 %v84
    %106 = vmatpush.msra.mxu0 %v83
    %107 = vmatpush.msra.mxu0 %v82
    %108 = vmatpush.msra.mxu0 %v81
    %109 = vmatpush.msra.mxu0 %v80
    %110 = vmatmul.f32.gmra.mxu0 %v92
    %v111 = vpop.f32.mrf.mxu0
    %v112 = vadd.f32 %v89, %v111
    %113 = vdwg.mxu0
    %v114 = vld [vmem:[#allocation8 + $0x1] sm:$0x1]
    %v115 = vld [vmem:[#allocation8 + $0x2] sm:$0x1]
    %116 = vadd.xlane.f32.xlu0 %v112
    %v117 = vpop.xlane.xlu0 %116
    %v118 = vmul.f32 %v117, 0.0078125
    %v119 = vsub.f32 %v112, %v118
    %v120 = vmul.f32 %v119, %v119
    %121 = vadd.xlane.f32.xlu0 %v120
    %v122 = vpop.xlane.xlu0 %121
    %v123 = vmul.f32 %v122, 0.0078125
    %v124 = vadd.f32 %v123, 1e-05
    %v125 = vrsqrt.pop %v124
    %v126 = vmul.f32 %v125, %v124
    %v127 = vmul.f32 %v126, %v125
    %v128 = vmul.f32 0.5, %v127
    %v129 = vsub.f32 1.5, %v128
    %v130 = vmul.f32 %v125, %v129
    %vm131 = vweird.f32 %v124
    %vm132 = vweird.f32 %v125
    %vm133 = vmor %vm131, %vm132
    %v134 = vsel %vm133, %v125, %v130
    %v135 = vmul.f32 %v119, %v134
    %v136 = vperm.slane %v114, 0
    %v137 = vmul.f32 %v135, %v136
    %v138 = vperm.slane %v115, 0
    %v139 = vadd.f32 %v137, %v138
    %v140 = vmax.f32 %v139, 0.0
    %v141 = vld [vmem:[#allocation7] sm:$0xff]
    %v142 = vld [vmem:[#allocation7 + $0x8] sm:$0xff]
    %v143 = vld [vmem:[#allocation7 + $0x10] sm:$0xff]
    %v144 = vld [vmem:[#allocation7 + $0x18] sm:$0xff]
    %v145 = vld [vmem:[#allocation7 + $0x20] sm:$0xff]
    %v146 = vld [vmem:[#allocation7 + $0x28] sm:$0xff]
    %v147 = vld [vmem:[#allocation7 + $0x30] sm:$0xff]
    %v148 = vld [vmem:[#allocation7 + $0x38] sm:$0xff]
    %v149 = vld [vmem:[#allocation7 + $0x40] sm:$0xff]
    %v150 = vld [vmem:[#allocation7 + $0x48] sm:$0xff]
    %v151 = vld [vmem:[#allocation7 + $0x50] sm:$0xff]
    %v152 = vld [vmem:[#allocation7 + $0x58] sm:$0xff]
    %v153 = vld [vmem:[#allocation7 + $0x60] sm:$0xff]
    %v154 = vld [vmem:[#allocation7 + $0x68] sm:$0xff]
    %v155 = vld [vmem:[#allocation7 + $0x70] sm:$0xff]
    %v156 = vld [vmem:[#allocation7 + $0x78] sm:$0xff]
    %157 = vmatpush.msra.mxu0 %v156
    %158 = vmatpush.msra.mxu0 %v155
    %159 = vmatpush.msra.mxu0 %v154
    %160 = vmatpush.msra.mxu0 %v153
    %161 = vmatpush.msra.mxu0 %v152
    %162 = vmatpush.msra.mxu0 %v151
    %163 = vmatpush.msra.mxu0 %v150
    %164 = vmatpush.msra.mxu0 %v149
    %165 = vmatpush.msra.mxu0 %v148
    %166 = vmatpush.msra.mxu0 %v147
    %167 = vmatpush.msra.mxu0 %v146
    %168 = vmatpush.msra.mxu0 %v145
    %169 = vmatpush.msra.mxu0 %v144
    %170 = vmatpush.msra.mxu0 %v143
    %171 = vmatpush.msra.mxu0 %v142
    %172 = vmatpush.msra.mxu0 %v141
    %173 = vmatmul.f32.gmra.mxu0 %v140
    %v174 = vpop.f32.mrf.mxu0
    %v175 = vadd.f32 0.0, %v174
    %176 = vdwg.mxu0
    %178 = vrot.lane.b32.xlu0 %v175, 64
    %v179 = vpop.permute.xlu0 %178
    %v181 = vmax.f32 %v175, %v179
    %s182 = scalar_lea.vmem [#allocation5], 64
    %v183 = vld [vmem:[%s182] sm:$0xff]
    %v184 = vld [vmem:[%s182 + $0x8] sm:$0xff]
    %v185 = vld [vmem:[%s182 + $0x10] sm:$0xff]
    %v186 = vld [vmem:[%s182 + $0x18] sm:$0xff]
    %v187 = vld [vmem:[%s182 + $0x20] sm:$0xff]
    %v188 = vld [vmem:[%s182 + $0x28] sm:$0xff]
    %v189 = vld [vmem:[%s182 + $0x30] sm:$0xff]
    %v190 = vld [vmem:[%s182 + $0x38] sm:$0xff]
    %v191 = vld [vmem:[#allocation8 + $0x3] sm:$0x1]
    %v192 = vperm.slane %v191, 0
    %v194 = vsel %vm90, %v181, 0
    %196 = vmatpush.msra.mxu0 0.0
    %197 = vmatpush.msra.mxu0 0.0
    %198 = vmatpush.msra.mxu0 0.0
    %199 = vmatpush.msra.mxu0 0.0
    %200 = vmatpush.msra.mxu0 0.0
    %201 = vmatpush.msra.mxu0 0.0
    %202 = vmatpush.msra.mxu0 0.0
    %203 = vmatpush.msra.mxu0 0.0
    %204 = vmatpush.msra.mxu0 %v190
    %205 = vmatpush.msra.mxu0 %v189
    %206 = vmatpush.msra.mxu0 %v188
    %207 = vmatpush.msra.mxu0 %v187
    %208 = vmatpush.msra.mxu0 %v186
    %209 = vmatpush.msra.mxu0 %v185
    %210 = vmatpush.msra.mxu0 %v184
    %211 = vmatpush.msra.mxu0 %v183
    %212 = vmatmul.f32.gmra.mxu0 %v194
    %v213 = vpop.f32.mrf.mxu0
    %v214 = vadd.f32 %v192, %v213
    %215 = vdwg.mxu0
    %v216 = vld [vmem:[#allocation8 + $0x4] sm:$0x1]
    %v217 = vld [vmem:[#allocation8 + $0x5] sm:$0x1]
    %218 = vadd.xlane.f32.xlu0 %v214
    %v219 = vpop.xlane.xlu0 %218
    %v220 = vmul.f32 %v219, 0.0078125
    %v221 = vsub.f32 %v214, %v220
    %v222 = vmul.f32 %v221, %v221
    %223 = vadd.xlane.f32.xlu0 %v222
    %v224 = vpop.xlane.xlu0 %223
    %v225 = vmul.f32 %v224, 0.0078125
    %v226 = vadd.f32 %v225, 1e-05
    %v227 = vrsqrt.pop %v226
    %v228 = vmul.f32 %v227, %v226
    %v229 = vmul.f32 %v228, %v227
    %v230 = vmul.f32 0.5, %v229
    %v231 = vsub.f32 1.5, %v230
    %v232 = vmul.f32 %v227, %v231
    %vm233 = vweird.f32 %v226
    %vm234 = vweird.f32 %v227
    %vm235 = vmor %vm233, %vm234
    %v236 = vsel %vm235, %v227, %v232
    %v237 = vmul.f32 %v221, %v236
    %v238 = vperm.slane %v216, 0
    %v239 = vmul.f32 %v237, %v238
    %v240 = vperm.slane %v217, 0
    %v241 = vadd.f32 %v239, %v240
    %v242 = vmax.f32 %v241, 0.0
    %s243 = scalar_lea.vmem [#allocation7], 128
    %v244 = vld [vmem:[%s243] sm:$0xff]
    %v245 = vld [vmem:[%s243 + $0x8] sm:$0xff]
    %v246 = vld [vmem:[%s243 + $0x10] sm:$0xff]
    %v247 = vld [vmem:[%s243 + $0x18] sm:$0xff]
    %v248 = vld [vmem:[%s243 + $0x20] sm:$0xff]
    %v249 = vld [vmem:[%s243 + $0x28] sm:$0xff]
    %v250 = vld [vmem:[%s243 + $0x30] sm:$0xff]
    %v251 = vld [vmem:[%s243 + $0x38] sm:$0xff]
    %v252 = vld [vmem:[%s243 + $0x40] sm:$0xff]
    %v253 = vld [vmem:[%s243 + $0x48] sm:$0xff]
    %v254 = vld [vmem:[%s243 + $0x50] sm:$0xff]
    %v255 = vld [vmem:[%s243 + $0x58] sm:$0xff]
    %v256 = vld [vmem:[%s243 + $0x60] sm:$0xff]
    %v257 = vld [vmem:[%s243 + $0x68] sm:$0xff]
    %v258 = vld [vmem:[%s243 + $0x70] sm:$0xff]
    %v259 = vld [vmem:[%s243 + $0x78] sm:$0xff]
    %260 = vmatpush.msra.mxu0 %v259
    %261 = vmatpush.msra.mxu0 %v258
    %262 = vmatpush.msra.mxu0 %v257
    %263 = vmatpush.msra.mxu0 %v256
    %264 = vmatpush.msra.mxu0 %v255
    %265 = vmatpush.msra.mxu0 %v254
    %266 = vmatpush.msra.mxu0 %v253
    %267 = vmatpush.msra.mxu0 %v252
    %268 = vmatpush.msra.mxu0 %v251
    %269 = vmatpush.msra.mxu0 %v250
    %270 = vmatpush.msra.mxu0 %v249
    %271 = vmatpush.msra.mxu0 %v248
    %272 = vmatpush.msra.mxu0 %v247
    %273 = vmatpush.msra.mxu0 %v246
    %274 = vmatpush.msra.mxu0 %v245
    %275 = vmatpush.msra.mxu0 %v244
    %276 = vmatmul.f32.gmra.mxu0 %v242
    %v277 = vpop.f32.mrf.mxu0
    %v278 = vadd.f32 0.0, %v277
    %279 = vdwg.mxu0
    %281 = vrot.lane.b32.xlu0 %v278, 64
    %v282 = vpop.permute.xlu0 %281
    %v284 = vmax.f32 %v278, %v282
    %s285 = scalar_lea.vmem [#allocation5], 128
    %v286 = vld [vmem:[%s285] sm:$0xff]
    %v287 = vld [vmem:[%s285 + $0x8] sm:$0xff]
    %v288 = vld [vmem:[%s285 + $0x10] sm:$0xff]
    %v289 = vld [vmem:[%s285 + $0x18] sm:$0xff]
    %v290 = vld [vmem:[%s285 + $0x20] sm:$0xff]
    %v291 = vld [vmem:[%s285 + $0x28] sm:$0xff]
    %v292 = vld [vmem:[%s285 + $0x30] sm:$0xff]
    %v293 = vld [vmem:[%s285 + $0x38] sm:$0xff]
    %v294 = vld [vmem:[#allocation8 + $0x6] sm:$0x1]
    %v295 = vperm.slane %v294, 0
    %v297 = vsel %vm90, %v284, 0
    %299 = vmatpush.msra.mxu0 0.0
    %300 = vmatpush.msra.mxu0 0.0
    %301 = vmatpush.msra.mxu0 0.0
    %302 = vmatpush.msra.mxu0 0.0
    %303 = vmatpush.msra.mxu0 0.0
    %304 = vmatpush.msra.mxu0 0.0
    %305 = vmatpush.msra.mxu0 0.0
    %306 = vmatpush.msra.mxu0 0.0
    %307 = vmatpush.msra.mxu0 %v293
    %308 = vmatpush.msra.mxu0 %v292
    %309 = vmatpush.msra.mxu0 %v291
    %310 = vmatpush.msra.mxu0 %v290
    %311 = vmatpush.msra.mxu0 %v289
    %312 = vmatpush.msra.mxu0 %v288
    %313 = vmatpush.msra.mxu0 %v287
    %314 = vmatpush.msra.mxu0 %v286
    %315 = vmatmul.f32.gmra.mxu0 %v297
    %v316 = vpop.f32.mrf.mxu0
    %v317 = vadd.f32 %v295, %v316
    %318 = vdwg.mxu0
    %v319 = vld [vmem:[#allocation8 + $0x7] sm:$0x1]
    %v320 = vld [vmem:[#allocation8 + $0x8] sm:$0x1]
    %vm321 = vcmask 261120
    %v322 = vsel %vm321, %v317, 0.0
    %323 = vadd.xlane.f32.xlu0 %v322
    %v324 = vpop.xlane.xlu0 %323
    %v325 = vmul.f32 %v324, 0.03125
    %v326 = vsub.f32 %v317, %v325
    %v327 = vmul.f32 %v326, %v326
    %v328 = vsel %vm321, %v327, 0.0
    %329 = vadd.xlane.f32.xlu0 %v328
    %v330 = vpop.xlane.xlu0 %329
    %v331 = vmul.f32 %v330, 0.03125
    %v332 = vadd.f32 %v331, 1e-05
    %v333 = vrsqrt.pop %v332
    %v334 = vmul.f32 %v333, %v332
    %v335 = vmul.f32 %v334, %v333
    %v336 = vmul.f32 0.5, %v335
    %v337 = vsub.f32 1.5, %v336
    %v338 = vmul.f32 %v333, %v337
    %vm339 = vweird.f32 %v332
    %vm340 = vweird.f32 %v333
    %vm341 = vmor %vm339, %vm340
    %v342 = vsel %vm341, %v333, %v338
    %v343 = vmul.f32 %v326, %v342
    %v344 = vperm.slane %v319, 0
    %v345 = vmul.f32 %v343, %v344
    %v346 = vperm.slane %v320, 0
    %v347 = vadd.f32 %v345, %v346
    %v348 = vmax.f32 %v347, 0.0
    %s349 = scalar_lea.vmem [#allocation5], 192
    %v350 = vld [vmem:[%s349] sm:$0xff]
    %v351 = vld [vmem:[%s349 + $0x8] sm:$0xff]
    %v352 = vld [vmem:[%s349 + $0x10] sm:$0xff]
    %v353 = vld [vmem:[%s349 + $0x18] sm:$0xff]
    %v354 = vld [vmem:[#allocation8 + $0x9] sm:$0x1]
    %v355 = vperm.slane %v354, 0
    %v357 = vsel %vm321, %v348, 0
    %359 = vmatpush.msra.mxu0 0.0
    %360 = vmatpush.msra.mxu0 0.0
    %361 = vmatpush.msra.mxu0 0.0
    %362 = vmatpush.msra.mxu0 0.0
    %363 = vmatpush.msra.mxu0 0.0
    %364 = vmatpush.msra.mxu0 0.0
    %365 = vmatpush.msra.mxu0 0.0
    %366 = vmatpush.msra.mxu0 0.0
    %367 = vmatpush.msra.mxu0 0.0
    %368 = vmatpush.msra.mxu0 0.0
    %369 = vmatpush.msra.mxu0 0.0
    %370 = vmatpush.msra.mxu0 0.0
    %371 = vmatpush.msra.mxu0 %v353
    %372 = vmatpush.msra.mxu0 %v352
    %373 = vmatpush.msra.mxu0 %v351
    %374 = vmatpush.msra.mxu0 %v350
    %375 = vmatmul.f32.gmra.mxu0 %v357
    %v376 = vpop.f32.mrf.mxu0
    %v377 = vadd.f32 %v355, %v376
    %378 = vdwg.mxu0
    %379 = vst [vmem:[#allocation10] sm:$0xff] %v377
    // Predicated region
    $region34: #{tpu_custom_call.1} parent=1 // pred_check
      _
    $region35: #{tpu_custom_call.1} parent=1 // pred_check_branch
      %381 = sbr.rel (0) target = $region37
    $region36: #{tpu_custom_call.1} parent=1 // pred_region
      %383 = vsyncadd [#allocation4], 0
      %s385 = sshll.u32 [#allocation10], 4
      %s386 = int_to_ptr.vmem [resolvable:$true] %s385
      %s387 = sshll.u32 %s4, 4
      %s388 = int_to_ptr.hbm [resolvable:$true] %s387
      %390 = dma.vmem_to_hbm [thread:$0]  %s386, 128, %s388, [#allocation4]
    $region37: #{tpu_custom_call.1} parent=1 // pred_fallthru
      _
    // Predicated region
    $region38: #{tpu_custom_call.1} parent=1 // pred_check
      _
    $region39: #{tpu_custom_call.1} parent=1 // pred_check_branch
      %392 = sbr.rel (0) target = $region41
    $region40: #{tpu_custom_call.1} parent=1 // pred_region
      %394 = dma.done [#allocation4], 128
    $region41: #{tpu_custom_call.1} parent=1 // pred_fallthru
      _
    %395 = vsyncpa [#allocation3], 1
    %396 = vsyncpa [#allocation6], 1
    %397 = vsyncpa [#allocation9], 1
    %398 = vsyncpa [#allocation4], 1

</llo_original>
